<compile_context>
chip_gen: v7x
topology: tpu7x:2x2x1
jax: 0.10.0
libtpu: 0.0.40
codegen_flags: <defaults>
</compile_context>

<pallas_src>
import functools

import jax
import jax.numpy as jnp
from jax.experimental import pallas as pl
from jax.experimental.pallas import tpu as pltpu

_LANE = 128
_SUBLANE = 8

# Flipped to False (once) if this JAX build rejects single-buffered BlockSpecs.
_SINGLE_BUFFER_OK = True


def _round_up(x: int, m: int) -> int:
    return ((x + m - 1) // m) * m


def _vmem_budget() -> int:
    """~85% of this generation's VMEM capacity (64 MiB conservative fallback)."""
    try:
        cap = int(pltpu.get_tpu_info().vmem_capacity_bytes)
    except Exception:
        cap = 64 << 20          # v7x per-TC size: safe on every generation
    return int(cap * 0.85)


def _pick_tm(batch: int) -> int:
    """Batch tile: multiple of 8, bounded padding (<=~12.5% for large batches)."""
    b8 = _round_up(batch, _SUBLANE)
    if b8 <= 512:
        return b8               # single batch tile, at most 7 padded rows
    for cand in (512, 256, 128, 64, 32, 16, 8):
        if (_round_up(batch, cand) - batch) * 8 <= batch:
            return cand
    return _SUBLANE


def _fused_plan(tm, in_p, h_p, x_bytes, w_bytes, h_bytes, budget):
    """Largest output tile tn such that the W1-resident fused plan fits VMEM."""
    for tn in (512, 256, 128):
        if h_p % tn:
            continue
        need = ((in_p * h_p + h_p) * w_bytes        # W1 + b1 (single-buffered)
                + 2 * tm * in_p * x_bytes           # x tile (double-buffered)
                + 2 * (h_p * tn + tn) * w_bytes     # W2 tile + b2
                + 2 * tm * tn * x_bytes             # output tile
                + tm * h_p * h_bytes                # h scratch
                + (2 << 20))                        # Mosaic internal headroom
        if need <= budget:
            return tn
    return None


def _linear_plan(tm, k_p, n_p, x_bytes, w_bytes, budget):
    """(tn, tk) for the K-tiled linear kernel that fits the VMEM budget."""
    for tn in (512, 256, 128):
        if n_p % tn:
            continue
        for tk in (2048, 1024, 512, 256, 128):
            if k_p % tk:
                continue
            need = (2 * tm * tk * x_bytes            # x tile
                    + 2 * (tk * tn + tn) * w_bytes   # W tile + bias
                    + 2 * tm * tn * x_bytes          # output tile
                    + tm * tn * 4                    # f32 accumulator
                    + (2 << 20))
            if need <= budget:
                return tn, tk
    return _LANE, _LANE


# ----------------------------- kernels ------------------------------------


def _fused_mlp_kernel(x_ref, w1_ref, b1_ref, w2_ref, b2_ref, o_ref, h_ref):
    # Layer 1 depends only on the batch tile: compute once per batch tile
    # (at j == 0; j is the sequential inner axis) and keep the activation h
    # resident in VMEM scratch -- it never touches HBM.
    @pl.when(pl.program_id(1) == 0)
    def _():
        h = jnp.dot(x_ref[...], w1_ref[...], preferred_element_type=jnp.float32)
        h_ref[...] = jnp.maximum(h + b1_ref[...], 0.0).astype(h_ref.dtype)

    # Layer 2, tiled over the output (lane) dimension of W2.
    y = jnp.dot(h_ref[...], w2_ref[...], preferred_element_type=jnp.float32)
    o_ref[...] = jnp.maximum(y + b2_ref[...], 0.0).astype(o_ref.dtype)


def _fused_mlp_recompute_kernel(x_ref, w1_ref, b1_ref, w2_ref, b2_ref, o_ref):
    # Small-batch variant: recompute layer 1 per output tile so BOTH grid axes
    # can be "parallel" (keeps both v7x TensorCores busy when grid_i == 1).
    h = jnp.dot(x_ref[...], w1_ref[...], preferred_element_type=jnp.float32)
    h = jnp.maximum(h + b1_ref[...], 0.0).astype(x_ref.dtype)
    y = jnp.dot(h, w2_ref[...], preferred_element_type=jnp.float32)
    o_ref[...] = jnp.maximum(y + b2_ref[...], 0.0).astype(o_ref.dtype)


def _linear_relu_kernel(x_ref, w_ref, b_ref, o_ref, acc_ref):
    # K-tiled y = relu(x @ W + b) with an f32 accumulator (bounded VMEM even
    # for very large input dims).
    @pl.when(pl.program_id(2) == 0)
    def _():
        acc_ref[...] = jnp.zeros_like(acc_ref)

    acc_ref[...] += jnp.dot(x_ref[...], w_ref[...],
                            preferred_element_type=jnp.float32)

    @pl.when(pl.program_id(2) == pl.num_programs(2) - 1)
    def _():
        o_ref[...] = jnp.maximum(acc_ref[...] + b_ref[...],
                                 0.0).astype(o_ref.dtype)


# --------------------------- pallas wrappers -------------------------------


def _linear_relu(x_pad, w_t, b_pad, tm, budget):
    b_p, k_p = x_pad.shape
    n_p = w_t.shape[1]
    x_bytes = x_pad.dtype.itemsize
    w_bytes = w_t.dtype.itemsize
    tn, tk = _linear_plan(tm, k_p, n_p, x_bytes, w_bytes, budget)
    grid = (b_p // tm, n_p // tn, k_p // tk)

    flops = 2 * b_p * k_p * n_p
    bytes_accessed = (x_pad.size * x_bytes
                      + (w_t.size + b_pad.size) * w_bytes
                      + b_p * n_p * x_bytes)

    return pl.pallas_call(
        _linear_relu_kernel,
        out_shape=jax.ShapeDtypeStruct((b_p, n_p), x_pad.dtype),
        grid_spec=pltpu.PrefetchScalarGridSpec(
            num_scalar_prefetch=0,
            grid=grid,
            in_specs=[
                pl.BlockSpec((tm, tk), lambda i, j, k: (i, k)),
                pl.BlockSpec((tk, tn), lambda i, j, k: (k, j)),
                pl.BlockSpec((1, tn), lambda i, j, k: (0, j)),
            ],
            out_specs=pl.BlockSpec((tm, tn), lambda i, j, k: (i, j)),
            scratch_shapes=[pltpu.VMEM((tm, tn), jnp.float32)],
        ),
        compiler_params=pltpu.CompilerParams(
            dimension_semantics=("parallel", "parallel", "arbitrary"),
            vmem_limit_bytes=budget),
        cost_estimate=pl.CostEstimate(
            flops=flops, transcendentals=0, bytes_accessed=bytes_accessed),
    )(x_pad, w_t, b_pad)


@functools.partial(jax.jit,
                   static_argnames=("num_hidden", "add_extra", "single_buffer"))
def _forward_impl(x, w1t, b1, w2t, b2, *, num_hidden, add_extra, single_buffer):
    batch, num_in = x.shape
    in_p, h_p = w1t.shape
    x_bytes = x.dtype.itemsize
    w_bytes = w1t.dtype.itemsize

    budget = _vmem_budget()
    tm = _pick_tm(batch)
    b_p = _round_up(batch, tm)
    grid_i = b_p // tm

    # Only the activation is padded per call; weights were padded once at init.
    xp = jnp.pad(x, ((0, b_p - batch), (0, in_p - num_in)))

    def resident_spec(shape):
        # Constant-index block -> DMA'd once; the default second pipeline
        # buffer is pure VMEM waste, so request a single buffer.
        if single_buffer:
            return pl.BlockSpec(shape, lambda i, j: (0, 0),
                                pipeline_mode=pl.Buffered(1))
        return pl.BlockSpec(shape, lambda i, j: (0, 0))

    out = None
    if add_extra:
        tn = _fused_plan(tm, in_p, h_p, x_bytes, w_bytes, x_bytes, budget)
        if tn is not None:
            grid_j = h_p // tn
            flops = 2 * b_p * in_p * h_p + 2 * b_p * h_p * h_p
            bytes_accessed = (xp.size * x_bytes
                              + (w1t.size + b1.size + w2t.size + b2.size) * w_bytes
                              + b_p * h_p * x_bytes)

            in_specs = [
                pl.BlockSpec((tm, in_p), lambda i, j: (i, 0)),   # x: batch tile
                resident_spec((in_p, h_p)),                      # W1 resident
                resident_spec((1, h_p)),                         # b1 resident
                pl.BlockSpec((h_p, tn), lambda i, j: (0, j)),    # W2: N-tiled
                pl.BlockSpec((1, tn), lambda i, j: (0, j)),      # b2: N-tiled
            ]
            out_spec = pl.BlockSpec((tm, tn), lambda i, j: (i, j))

            if grid_i == 1 and grid_j > 1:
                # One batch tile: recompute layer 1 per output tile so both
                # grid axes stay "parallel" (v7x megacore for small batches).
                kernel = _fused_mlp_recompute_kernel
                scratch = []
                dims = ("parallel", "parallel")
            else:
                kernel = _fused_mlp_kernel
                # h scratch in the input dtype; never written to HBM.
                scratch = [pltpu.VMEM((tm, h_p), x.dtype)]
                # j reuses the h scratch written at j == 0 -> must be sequential.
                dims = ("parallel", "arbitrary")

            out = pl.pallas_call(
                kernel,
                out_shape=jax.ShapeDtypeStruct((b_p, h_p), x.dtype),
                grid_spec=pltpu.PrefetchScalarGridSpec(
                    num_scalar_prefetch=0,
                    grid=(grid_i, grid_j),
                    in_specs=in_specs,
                    out_specs=out_spec,
                    scratch_shapes=scratch,
                ),
                compiler_params=pltpu.CompilerParams(
                    dimension_semantics=dims,
                    vmem_limit_bytes=budget),
                cost_estimate=pl.CostEstimate(
                    flops=flops, transcendentals=0,
                    bytes_accessed=bytes_accessed),
            )(xp, w1t, b1, w2t, b2)

    if out is None:
        # add_extra=False, or the W1-resident fused plan doesn't fit VMEM:
        # layer-by-layer K-tiled path with bounded VMEM.
        h = _linear_relu(xp, w1t, b1, tm, budget)
        out = _linear_relu(h, w2t, b2, tm, budget) if add_extra else h

    return out[:batch, :num_hidden]          # strip padding


# ------------------------------ public API ---------------------------------


def prepare_params(params, add_extra: bool):
    """One-time: pad weights to lane multiples and pre-transpose to [K, N]."""
    num_hidden, num_in = params["w1"].shape
    in_p = _round_up(num_in, _LANE)
    h_p = _round_up(num_hidden, _LANE)

    w1t = jnp.pad(params["w1"],
                  ((0, h_p - num_hidden), (0, in_p - num_in))).T   # [in_p, h_p]
    b1 = jnp.pad(params["b1"], ((0, 0), (0, h_p - num_hidden)))

    prepared = {
        "w1t": w1t, "b1": b1, "w2t": None, "b2": None,
        "num_in": num_in, "num_hidden": num_hidden, "add_extra": add_extra,
    }
    if add_extra:
        prepared["w2t"] = jnp.pad(params["w2"],
                                  ((0, h_p - num_hidden),) * 2).T  # [h_p, h_p]
        prepared["b2"] = jnp.pad(params["b2"], ((0, 0), (0, h_p - num_hidden)))
    return prepared


def mlp_forward(x, prepared):
    """Pallas forward pass for MLP, including handle_batch_dim semantics."""
    # TODO(synk): at the tiny production shapes (B~2, hidden~32) launch and
    # grid-step overhead dominate; batch many MLP evaluations into one call.
    global _SINGLE_BUFFER_OK
    squeeze = x.ndim == 1
    if squeeze:
        x = x[None, :]                       # handle_batch_dim: add batch dim

    args = (x, prepared["w1t"], prepared["b1"], prepared["w2t"], prepared["b2"])
    kwargs = dict(num_hidden=prepared["num_hidden"],
                  add_extra=prepared["add_extra"])

    out = None
    if _SINGLE_BUFFER_OK:
        try:
            out = _forward_impl(*args, single_buffer=True, **kwargs)
        except Exception:
            _SINGLE_BUFFER_OK = False        # remember; don't retry each call
    if out is None:
        out = _forward_impl(*args, single_buffer=False, **kwargs)

    return out[0, ...] if squeeze else out   # handle_batch_dim: drop batch dim


def init_mlp_params(key, num_in: int, num_hidden: int, add_extra: bool):
    """Deterministic init mimicking nn.Linear default (uniform +-1/sqrt(fan_in))."""
    k1, k2, k3, k4 = jax.random.split(key, 4)
    bound1 = 1.0 / jnp.sqrt(num_in)
    params = {
        "w1": jax.random.uniform(k1, (num_hidden, num_in), jnp.float32,
                                 -bound1, bound1),
        "b1": jax.random.uniform(k2, (1, num_hidden), jnp.float32,
                                 -bound1, bound1),
    }
    if add_extra:
        bound2 = 1.0 / jnp.sqrt(num_hidden)
        params["w2"] = jax.random.uniform(k3, (num_hidden, num_hidden),
                                          jnp.float32, -bound2, bound2)
        params["b2"] = jax.random.uniform(k4, (1, num_hidden), jnp.float32,
                                          -bound2, bound2)
    return params


def _reference(x, params, add_extra):
    squeeze = x.ndim == 1
    if squeeze:
        x = x[None, :]
    h = jnp.maximum(x @ params["w1"].T + params["b1"], 0.0)
    if add_extra:
        h = jnp.maximum(h @ params["w2"].T + params["b2"], 0.0)
    return h[0] if squeeze else h


if __name__ == "__main__":
    key = jax.random.PRNGKey(0)
    kx, kp = jax.random.split(key)

    batch, num_in, num_hidden = 2, 16, 32
    add_extra = True

    params = init_mlp_params(kp, num_in, num_hidden, add_extra)
    prepared = prepare_params(params, add_extra)

    # batched input
    x = jax.random.normal(kx, (batch, num_in), jnp.float32)
    out = mlp_forward(x, prepared)
    jax.block_until_ready(out)
    ref = _reference(x, params, add_extra)
    assert out.shape == (batch, num_hidden)
    assert jnp.allclose(out, ref, atol=1e-5), "mismatch vs reference (batched)"

    # 1-D input path (handle_batch_dim)
    x1 = x[0]
    out1 = mlp_forward(x1, prepared)
    jax.block_until_ready(out1)
    ref1 = _reference(x1, params, add_extra)
    assert out1.shape == (num_hidden,)
    assert jnp.allclose(out1, ref1, atol=1e-5), "mismatch vs reference (1-D)"

    # add_extra=False variant (K-tiled linear kernel path)
    params_ne = init_mlp_params(kp, num_in, num_hidden, False)
    prepared_ne = prepare_params(params_ne, False)
    out_ne = mlp_forward(x, prepared_ne)
    jax.block_until_ready(out_ne)
    assert jnp.allclose(out_ne, _reference(x, params_ne, False), atol=1e-5)

    print("KERNEL_OK")
</pallas_src>

<mosaic_0001>
module attributes {stable_mosaic.version = 11 : i64} {
  func.func @_fused_mlp_kernel(%arg0: i32, %arg1: i32, %arg2: memref<8x128xf32, #tpu.memory_space<vmem>>, %arg3: memref<128x128xf32, #tpu.memory_space<vmem>>, %arg4: memref<1x128xf32, #tpu.memory_space<vmem>>, %arg5: memref<128x128xf32, #tpu.memory_space<vmem>>, %arg6: memref<1x128xf32, #tpu.memory_space<vmem>>, %arg7: memref<8x128xf32, #tpu.memory_space<vmem>>, %arg8: memref<8x128xf32, #tpu.memory_space<vmem>>) attributes {dimension_semantics = [#tpu.dimension_semantics<parallel>, #tpu.dimension_semantics<arbitrary>], iteration_bounds = array<i64: 1, 1>, scalar_prefetch = 0 : i64, scratch_operands = 1 : i64, tpu.core_type = #tpu.core_type<tc>, window_params = [{transform_indices = @transform_0, window_bounds = array<i64: 8, 128>}, {pipeline_mode = #tpu.pipeline_mode<synchronous>, transform_indices = @transform_1, window_bounds = array<i64: 128, 128>}, {pipeline_mode = #tpu.pipeline_mode<synchronous>, transform_indices = @transform_2, window_bounds = array<i64: 1, 128>}, {transform_indices = @transform_3, window_bounds = array<i64: 128, 128>}, {transform_indices = @transform_4, window_bounds = array<i64: 1, 128>}, {transform_indices = @transform_5, window_bounds = array<i64: 8, 128>}]} {
    %c0_i32 = arith.constant 0 : i32
    %0 = arith.cmpi eq, %arg1, %c0_i32 : i32
    %1 = arith.extui %0 : i1 to i32
    %c0_i32_0 = arith.constant 0 : i32
    %2 = arith.cmpi ne, %1, %c0_i32_0 : i32
    scf.if %2 {
      %c0_9 = arith.constant 0 : index
      %c0_10 = arith.constant 0 : index
      %12 = vector.load %arg2[%c0_9, %c0_10] : memref<8x128xf32, #tpu.memory_space<vmem>>, vector<8x128xf32>
      %c0_11 = arith.constant 0 : index
      %c0_12 = arith.constant 0 : index
      %13 = vector.load %arg3[%c0_11, %c0_12] : memref<128x128xf32, #tpu.memory_space<vmem>>, vector<128x128xf32>
      %cst_13 = arith.constant dense<0.000000e+00> : vector<8x128xf32>
      %14 = tpu.matmul %12, %13, %cst_13 {dimension_numbers = #tpu.dot_dimension_numbers<[1], [0], [0], [1], [0, 0, 1, 1], [], []>} : vector<8x128xf32>, vector<128x128xf32>, vector<8x128xf32> -> vector<8x128xf32>
      %c0_14 = arith.constant 0 : index
      %c0_15 = arith.constant 0 : index
      %15 = vector.load %arg4[%c0_14, %c0_15] : memref<1x128xf32, #tpu.memory_space<vmem>>, vector<1x128xf32>
      %16 = vector.broadcast %15 : vector<1x128xf32> to vector<8x128xf32>
      %17 = arith.addf %14, %16 : vector<8x128xf32>
      %cst_16 = arith.constant 0.000000e+00 : f32
      %18 = vector.broadcast %cst_16 : f32 to vector<8x128xf32>
      %19 = arith.maximumf %17, %18 : vector<8x128xf32>
      %c0_17 = arith.constant 0 : index
      %c0_18 = arith.constant 0 : index
      %20 = vector.load %arg8[%c0_17, %c0_18] : memref<8x128xf32, #tpu.memory_space<vmem>>, vector<8x128xf32>
      tpu.vector_store %arg8[%c0_17, %c0_18], %19 {strides = array<i32>} : memref<8x128xf32, #tpu.memory_space<vmem>>, vector<8x128xf32>,
    } else {
    }
    %c0 = arith.constant 0 : index
    %c0_1 = arith.constant 0 : index
    %3 = vector.load %arg8[%c0, %c0_1] : memref<8x128xf32, #tpu.memory_space<vmem>>, vector<8x128xf32>
    %c0_2 = arith.constant 0 : index
    %c0_3 = arith.constant 0 : index
    %4 = vector.load %arg5[%c0_2, %c0_3] : memref<128x128xf32, #tpu.memory_space<vmem>>, vector<128x128xf32>
    %cst = arith.constant dense<0.000000e+00> : vector<8x128xf32>
    %5 = tpu.matmul %3, %4, %cst {dimension_numbers = #tpu.dot_dimension_numbers<[1], [0], [0], [1], [0, 0, 1, 1], [], []>} : vector<8x128xf32>, vector<128x128xf32>, vector<8x128xf32> -> vector<8x128xf32>
    %c0_4 = arith.constant 0 : index
    %c0_5 = arith.constant 0 : index
    %6 = vector.load %arg6[%c0_4, %c0_5] : memref<1x128xf32, #tpu.memory_space<vmem>>, vector<1x128xf32>
    %7 = vector.broadcast %6 : vector<1x128xf32> to vector<8x128xf32>
    %8 = arith.addf %5, %7 : vector<8x128xf32>
    %cst_6 = arith.constant 0.000000e+00 : f32
    %9 = vector.broadcast %cst_6 : f32 to vector<8x128xf32>
    %10 = arith.maximumf %8, %9 : vector<8x128xf32>
    %c0_7 = arith.constant 0 : index
    %c0_8 = arith.constant 0 : index
    %11 = vector.load %arg7[%c0_7, %c0_8] : memref<8x128xf32, #tpu.memory_space<vmem>>, vector<8x128xf32>
    tpu.vector_store %arg7[%c0_7, %c0_8], %10 {strides = array<i32>} : memref<8x128xf32, #tpu.memory_space<vmem>>, vector<8x128xf32>,
    return
  }
  func.func @transform_0(%arg0: i32, %arg1: i32) -> (i32, i32) {
    %c0_i32 = arith.constant 0 : i32
    %c0_i32_0 = arith.constant 0 : i32
    return %arg0, %c0_i32 : i32, i32
  }
  func.func @transform_1(%arg0: i32, %arg1: i32) -> (i32, i32) {
    %c0_i32 = arith.constant 0 : i32
    %c0_i32_0 = arith.constant 0 : i32
    %c0_i32_1 = arith.constant 0 : i32
    return %c0_i32, %c0_i32_0 : i32, i32
  }
  func.func @transform_2(%arg0: i32, %arg1: i32) -> (i32, i32) {
    %c0_i32 = arith.constant 0 : i32
    %c0_i32_0 = arith.constant 0 : i32
    %c0_i32_1 = arith.constant 0 : i32
    return %c0_i32, %c0_i32_0 : i32, i32
  }
  func.func @transform_3(%arg0: i32, %arg1: i32) -> (i32, i32) {
    %c0_i32 = arith.constant 0 : i32
    %c0_i32_0 = arith.constant 0 : i32
    return %c0_i32, %arg1 : i32, i32
  }
  func.func @transform_4(%arg0: i32, %arg1: i32) -> (i32, i32) {
    %c0_i32 = arith.constant 0 : i32
    %c0_i32_0 = arith.constant 0 : i32
    return %c0_i32, %arg1 : i32, i32
  }
  func.func @transform_5(%arg0: i32, %arg1: i32) -> (i32, i32) {
    %c0_i32 = arith.constant 0 : i32
    return %arg0, %arg1 : i32, i32
  }
}

module attributes {stable_mosaic.version = 11 : i64} {
  func.func @_fused_mlp_kernel(%arg0: i32, %arg1: i32, %arg2: memref<8x128xf32, #tpu.memory_space<vmem>>, %arg3: memref<128x128xf32, #tpu.memory_space<vmem>>, %arg4: memref<1x128xf32, #tpu.memory_space<vmem>>, %arg5: memref<128x128xf32, #tpu.memory_space<vmem>>, %arg6: memref<1x128xf32, #tpu.memory_space<vmem>>, %arg7: memref<8x128xf32, #tpu.memory_space<vmem>>, %arg8: memref<8x128xf32, #tpu.memory_space<vmem>>) attributes {dimension_semantics = [#tpu.dimension_semantics<parallel>, #tpu.dimension_semantics<arbitrary>], iteration_bounds = array<i64: 1, 1>, scalar_prefetch = 0 : i64, scratch_operands = 1 : i64, tpu.core_type = #tpu.core_type<tc>, window_params = [{transform_indices = @transform_0, window_bounds = array<i64: 8, 128>}, {pipeline_mode = #tpu.pipeline_mode<synchronous>, transform_indices = @transform_1, window_bounds = array<i64: 128, 128>}, {pipeline_mode = #tpu.pipeline_mode<synchronous>, transform_indices = @transform_2, window_bounds = array<i64: 1, 128>}, {transform_indices = @transform_3, window_bounds = array<i64: 128, 128>}, {transform_indices = @transform_4, window_bounds = array<i64: 1, 128>}, {transform_indices = @transform_5, window_bounds = array<i64: 8, 128>}]} {
    %c0_i32 = arith.constant 0 : i32
    %0 = arith.cmpi eq, %arg1, %c0_i32 : i32
    %1 = arith.extui %0 : i1 to i32
    %c0_i32_0 = arith.constant 0 : i32
    %2 = arith.cmpi ne, %1, %c0_i32_0 : i32
    scf.if %2 {
      %c0_9 = arith.constant 0 : index
      %c0_10 = arith.constant 0 : index
      %12 = vector.load %arg2[%c0_9, %c0_10] : memref<8x128xf32, #tpu.memory_space<vmem>>, vector<8x128xf32>
      %c0_11 = arith.constant 0 : index
      %c0_12 = arith.constant 0 : index
      %13 = vector.load %arg3[%c0_11, %c0_12] : memref<128x128xf32, #tpu.memory_space<vmem>>, vector<128x128xf32>
      %cst_13 = arith.constant dense<0.000000e+00> : vector<8x128xf32>
      %14 = tpu.matmul %12, %13, %cst_13 {dimension_numbers = #tpu.dot_dimension_numbers<[1], [0], [0], [1], [0, 0, 1, 1], [], []>} : vector<8x128xf32>, vector<128x128xf32>, vector<8x128xf32> -> vector<8x128xf32>
      %c0_14 = arith.constant 0 : index
      %c0_15 = arith.constant 0 : index
      %15 = vector.load %arg4[%c0_14, %c0_15] : memref<1x128xf32, #tpu.memory_space<vmem>>, vector<1x128xf32>
      %16 = vector.broadcast %15 : vector<1x128xf32> to vector<8x128xf32>
      %17 = arith.addf %14, %16 : vector<8x128xf32>
      %cst_16 = arith.constant 0.000000e+00 : f32
      %18 = vector.broadcast %cst_16 : f32 to vector<8x128xf32>
      %19 = arith.maximumf %17, %18 : vector<8x128xf32>
      %c0_17 = arith.constant 0 : index
      %c0_18 = arith.constant 0 : index
      %20 = vector.load %arg8[%c0_17, %c0_18] : memref<8x128xf32, #tpu.memory_space<vmem>>, vector<8x128xf32>
      tpu.vector_store %arg8[%c0_17, %c0_18], %19 {strides = array<i32>} : memref<8x128xf32, #tpu.memory_space<vmem>>, vector<8x128xf32>,
    } else {
    }
    %c0 = arith.constant 0 : index
    %c0_1 = arith.constant 0 : index
    %3 = vector.load %arg8[%c0, %c0_1] : memref<8x128xf32, #tpu.memory_space<vmem>>, vector<8x128xf32>
    %c0_2 = arith.constant 0 : index
    %c0_3 = arith.constant 0 : index
    %4 = vector.load %arg5[%c0_2, %c0_3] : memref<128x128xf32, #tpu.memory_space<vmem>>, vector<128x128xf32>
    %cst = arith.constant dense<0.000000e+00> : vector<8x128xf32>
    %5 = tpu.matmul %3, %4, %cst {dimension_numbers = #tpu.dot_dimension_numbers<[1], [0], [0], [1], [0, 0, 1, 1], [], []>} : vector<8x128xf32>, vector<128x128xf32>, vector<8x128xf32> -> vector<8x128xf32>
    %c0_4 = arith.constant 0 : index
    %c0_5 = arith.constant 0 : index
    %6 = vector.load %arg6[%c0_4, %c0_5] : memref<1x128xf32, #tpu.memory_space<vmem>>, vector<1x128xf32>
    %7 = vector.broadcast %6 : vector<1x128xf32> to vector<8x128xf32>
    %8 = arith.addf %5, %7 : vector<8x128xf32>
    %cst_6 = arith.constant 0.000000e+00 : f32
    %9 = vector.broadcast %cst_6 : f32 to vector<8x128xf32>
    %10 = arith.maximumf %8, %9 : vector<8x128xf32>
    %c0_7 = arith.constant 0 : index
    %c0_8 = arith.constant 0 : index
    %11 = vector.load %arg7[%c0_7, %c0_8] : memref<8x128xf32, #tpu.memory_space<vmem>>, vector<8x128xf32>
    tpu.vector_store %arg7[%c0_7, %c0_8], %10 {strides = array<i32>} : memref<8x128xf32, #tpu.memory_space<vmem>>, vector<8x128xf32>,
    return
  }
  func.func @transform_0(%arg0: i32, %arg1: i32) -> (i32, i32) {
    %c0_i32 = arith.constant 0 : i32
    %c0_i32_0 = arith.constant 0 : i32
    return %arg0, %c0_i32 : i32, i32
  }
  func.func @transform_1(%arg0: i32, %arg1: i32) -> (i32, i32) {
    %c0_i32 = arith.constant 0 : i32
    %c0_i32_0 = arith.constant 0 : i32
    %c0_i32_1 = arith.constant 0 : i32
    return %c0_i32, %c0_i32_0 : i32, i32
  }
  func.func @transform_2(%arg0: i32, %arg1: i32) -> (i32, i32) {
    %c0_i32 = arith.constant 0 : i32
    %c0_i32_0 = arith.constant 0 : i32
    %c0_i32_1 = arith.constant 0 : i32
    return %c0_i32, %c0_i32_0 : i32, i32
  }
  func.func @transform_3(%arg0: i32, %arg1: i32) -> (i32, i32) {
    %c0_i32 = arith.constant 0 : i32
    %c0_i32_0 = arith.constant 0 : i32
    return %c0_i32, %arg1 : i32, i32
  }
  func.func @transform_4(%arg0: i32, %arg1: i32) -> (i32, i32) {
    %c0_i32 = arith.constant 0 : i32
    %c0_i32_0 = arith.constant 0 : i32
    return %c0_i32, %arg1 : i32, i32
  }
  func.func @transform_5(%arg0: i32, %arg1: i32) -> (i32, i32) {
    %c0_i32 = arith.constant 0 : i32
    return %arg0, %arg1 : i32, i32
  }
}

</mosaic_0001>

<llo_original>
// kernel: _forward_impl.1
$region0: #{_forward_impl.1}
  #allocation0 [shape = 'u32[]', space=smem, size = 0x4, offset = 0x4, fixed_abs, tag = 'smem constant byte address 0x4 - core index']
  #allocation1 [shape = 'u32[144,128]{1,0:T(1,128)}', space=vmem, size = 0x12000, scoped, tag = 'internal scratch']
  #allocation2 [shape = 'f32[8,128]{1,0:T(8,128)}', space=vmem, size = 0x1000, scoped, tag = 'scratch operand']
  %s0 = inlined_call_operand.vmem [shape: f32[8,128], index: 0, kind: input, shape index: {}]
  %s1 = inlined_call_operand.hbm [shape: f32[128,128], index: 1, kind: input, shape index: {}]
  %s2 = inlined_call_operand.vmem [shape: f32[1,128], index: 2, kind: input, shape index: {}]
  %s3 = inlined_call_operand.hbm [shape: f32[128,128], index: 3, kind: input, shape index: {}]
  %s4 = inlined_call_operand.vmem [shape: f32[1,128], index: 4, kind: input, shape index: {}]
  %s5 = inlined_call_operand.vmem [shape: f32[8,128], index: 5, kind: output, shape index: {}]
  %s6 = sld [smem:[#allocation0]]
  $region42: #{_forward_impl.1} parent=0
    _
  %s8 = ssub.s32 1, %s6
  %s9 = scalar_select 0, %s8, %s6
  $region1: #{_forward_impl.1} parent=0
    #allocation3 [shape = 'u8[65536]{0}', space=vmem, size = 0x10000, scoped, tag = 'input window, operand 1, single buffered']
    #allocation4 [shape = 's32[1]{0}', space=sflag, size = 0x4, scoped, tag = 'scoped memory for _forward_impl.1']
    #allocation5 [shape = 'u8[65536]{0}', space=vmem, size = 0x10000, scoped, tag = 'input window, operand 3, single buffered']
    #allocation6 [shape = 's32[1]{0}', space=sflag, size = 0x4, scoped, tag = 'scoped memory for _forward_impl.1']
    %10 = vsyncpa [#allocation4], 0
    %11 = vsyncpa [#allocation6], 0
    // Predicated region
    $region2: #{_forward_impl.1} parent=1 // pred_check
      _
    $region3: #{_forward_impl.1} parent=1 // pred_check_branch
      %13 = sbr.rel (0) target = $region5
    $region4: #{_forward_impl.1} parent=1 // pred_region
      _
    $region5: #{_forward_impl.1} parent=1 // pred_fallthru
      _
    // Predicated region
    $region6: #{_forward_impl.1} parent=1 // pred_check
      _
    $region7: #{_forward_impl.1} parent=1 // pred_check_branch
      %15 = sbr.rel (0) target = $region9
    $region8: #{_forward_impl.1} parent=1 // pred_region
      %s17 = ssub.s32 2048, 2048
      %18 = vsyncadd [#allocation4], %s17
      %s19 = sshll.u32 [#allocation3], 4
      %s20 = int_to_ptr.vmem [resolvable:$true] %s19
      %25 = dma.hbm_to_vmem [thread:$0]  %s1, 2048, %s20, [#allocation4], 128, 128, 8
    $region9: #{_forward_impl.1} parent=1 // pred_fallthru
      _
    // Predicated region
    $region10: #{_forward_impl.1} parent=1 // pred_check
      _
    $region11: #{_forward_impl.1} parent=1 // pred_check_branch
      %27 = sbr.rel (0) target = $region13
    $region12: #{_forward_impl.1} parent=1 // pred_region
      _
    $region13: #{_forward_impl.1} parent=1 // pred_fallthru
      _
    // Predicated region
    $region14: #{_forward_impl.1} parent=1 // pred_check
      _
    $region15: #{_forward_impl.1} parent=1 // pred_check_branch
      %29 = sbr.rel (0) target = $region17
    $region16: #{_forward_impl.1} parent=1 // pred_region
      %s31 = ssub.s32 2048, 2048
      %32 = vsyncadd [#allocation6], %s31
      %s33 = sshll.u32 [#allocation5], 4
      %s34 = int_to_ptr.vmem [resolvable:$true] %s33
      %39 = dma.hbm_to_vmem [thread:$0]  %s3, 2048, %s34, [#allocation6], 128, 128, 8
    $region17: #{_forward_impl.1} parent=1 // pred_fallthru
      _
    // Predicated region
    $region18: #{_forward_impl.1} parent=1 // pred_check
      _
    $region19: #{_forward_impl.1} parent=1 // pred_check_branch
      %41 = sbr.rel (0) target = $region21
    $region20: #{_forward_impl.1} parent=1 // pred_region
      _
    $region21: #{_forward_impl.1} parent=1 // pred_fallthru
      _
    // Predicated region
    $region22: #{_forward_impl.1} parent=1 // pred_check
      _
    $region23: #{_forward_impl.1} parent=1 // pred_check_branch
      %43 = sbr.rel (0) target = $region25
    $region24: #{_forward_impl.1} parent=1 // pred_region
      %44 = dma.done [#allocation4], 2048
    $region25: #{_forward_impl.1} parent=1 // pred_fallthru
      _
    // Predicated region
    $region26: #{_forward_impl.1} parent=1 // pred_check
      _
    $region27: #{_forward_impl.1} parent=1 // pred_check_branch
      %46 = sbr.rel (0) target = $region29
    $region28: #{_forward_impl.1} parent=1 // pred_region
      %47 = dma.done [#allocation6], 2048
    $region29: #{_forward_impl.1} parent=1 // pred_fallthru
      _
    %p48 = scmp.eq.s32.totalorder 0, 0
    // Predicated region
    $region30: #{_forward_impl.1} parent=1 // pred_check
      %p49 = pneg %p48
    $region31: #{_forward_impl.1} parent=1 // pred_check_branch
      %51 = sbr.rel (%p49) target = $region33
    $region32: #{_forward_impl.1} parent=1 // pred_region
      %v52 = vld [vmem:[%s0] sm:$0xff]
      %v53 = vld [vmem:[#allocation3] sm:$0xff]
      %v54 = vld [vmem:[#allocation3 + $0x8] sm:$0xff]
      %v55 = vld [vmem:[#allocation3 + $0x10] sm:$0xff]
      %v56 = vld [vmem:[#allocation3 + $0x18] sm:$0xff]
      %v57 = vld [vmem:[#allocation3 + $0x20] sm:$0xff]
      %v58 = vld [vmem:[#allocation3 + $0x28] sm:$0xff]
      %v59 = vld [vmem:[#allocation3 + $0x30] sm:$0xff]
      %v60 = vld [vmem:[#allocation3 + $0x38] sm:$0xff]
      %v61 = vld [vmem:[#allocation3 + $0x40] sm:$0xff]
      %v62 = vld [vmem:[#allocation3 + $0x48] sm:$0xff]
      %v63 = vld [vmem:[#allocation3 + $0x50] sm:$0xff]
      %v64 = vld [vmem:[#allocation3 + $0x58] sm:$0xff]
      %v65 = vld [vmem:[#allocation3 + $0x60] sm:$0xff]
      %v66 = vld [vmem:[#allocation3 + $0x68] sm:$0xff]
      %v67 = vld [vmem:[#allocation3 + $0x70] sm:$0xff]
      %v68 = vld [vmem:[#allocation3 + $0x78] sm:$0xff]
      %v69 = vld [vmem:[%s2] sm:$0x1]
      %v71 = vlaneseq
      %v72 = vshrl.u32 %v71, 7
      %v73 = vsub.s32 0, %v72
      %v74 = vrot.slane %v69, %v73
      %76 = vmatprep.subr.mxu0 0.0
      %77 = vmatpush1.msra.mxu0 %v53
      %78 = vmatprep.subr.mxu0 0.0
      %79 = vmatpush1.msra.mxu0 %v54
      %80 = vmatprep.subr.mxu0 0.0
      %81 = vmatpush1.msra.mxu0 %v55
      %82 = vmatprep.subr.mxu0 0.0
      %83 = vmatpush1.msra.mxu0 %v56
      %84 = vmatprep.subr.mxu0 0.0
      %85 = vmatpush1.msra.mxu0 %v57
      %86 = vmatprep.subr.mxu0 0.0
      %87 = vmatpush1.msra.mxu0 %v58
      %88 = vmatprep.subr.mxu0 0.0
      %89 = vmatpush1.msra.mxu0 %v59
      %90 = vmatprep.subr.mxu0 0.0
      %91 = vmatpush1.msra.mxu0 %v60
      %92 = vmatprep.subr.mxu0 0.0
      %93 = vmatpush1.msra.mxu0 %v61
      %94 = vmatprep.subr.mxu0 0.0
      %95 = vmatpush1.msra.mxu0 %v62
      %96 = vmatprep.subr.mxu0 0.0
      %97 = vmatpush1.msra.mxu0 %v63
      %98 = vmatprep.subr.mxu0 0.0
      %99 = vmatpush1.msra.mxu0 %v64
      %100 = vmatprep.subr.mxu0 0.0
      %101 = vmatpush1.msra.mxu0 %v65
      %102 = vmatprep.subr.mxu0 0.0
      %103 = vmatpush1.msra.mxu0 %v66
      %104 = vmatprep.subr.mxu0 0.0
      %105 = vmatpush1.msra.mxu0 %v67
      %106 = vmatprep.subr.mxu0 0.0
      %107 = vmatpush1.msra.mxu0 %v68
      %108 = vmatprep.subr.mxu0 0.0
      %109 = vmatpush1.msra.mxu0 0.0
      %110 = vmatprep.subr.mxu0 0.0
      %111 = vmatpush1.msra.mxu0 0.0
      %112 = vmatprep.subr.mxu0 0.0
      %113 = vmatpush1.msra.mxu0 0.0
      %114 = vmatprep.subr.mxu0 0.0
      %115 = vmatpush1.msra.mxu0 0.0
      %116 = vmatprep.subr.mxu0 0.0
      %117 = vmatpush1.msra.mxu0 0.0
      %118 = vmatprep.subr.mxu0 0.0
      %119 = vmatpush1.msra.mxu0 0.0
      %120 = vmatprep.subr.mxu0 0.0
      %121 = vmatpush1.msra.mxu0 0.0
      %122 = vmatprep.subr.mxu0 0.0
      %123 = vmatpush1.msra.mxu0 0.0
      %124 = vmatprep.subr.mxu0 0.0
      %125 = vmatpush1.msra.mxu0 0.0
      %126 = vmatprep.subr.mxu0 0.0
      %127 = vmatpush1.msra.mxu0 0.0
      %128 = vmatprep.subr.mxu0 0.0
      %129 = vmatpush1.msra.mxu0 0.0
      %130 = vmatprep.subr.mxu0 0.0
      %131 = vmatpush1.msra.mxu0 0.0
      %132 = vmatprep.subr.mxu0 0.0
      %133 = vmatpush1.msra.mxu0 0.0
      %134 = vmatprep.subr.mxu0 0.0
      %135 = vmatpush1.msra.mxu0 0.0
      %136 = vmatprep.subr.mxu0 0.0
      %137 = vmatpush1.msra.mxu0 0.0
      %138 = vmatprep.subr.mxu0 0.0
      %139 = vmatpush1.msra.mxu0 0.0
      %140 = vmatprep.mubr.f32.mxu0 0.0
      %141 = vmatmul.mubr.f32.gmra.mrb[0].mxu0 %v52
      %v142 = vpop.f32.mrb[0].mxu0
      %v143 = vadd.f32 %v74, %v142
      %v144 = vpop.f32.mrb[0].mxu0
      %145 = vdwg.mxu0
      %v146 = vmax.f32 %v143, 0.0
      %147 = vst [vmem:[#allocation2] sm:$0xff] %v146
    $region33: #{_forward_impl.1} parent=1 // pred_fallthru
      _
    %v148 = vld [vmem:[#allocation2] sm:$0xff]
    %v149 = vld [vmem:[#allocation5] sm:$0xff]
    %v150 = vld [vmem:[#allocation5 + $0x8] sm:$0xff]
    %v151 = vld [vmem:[#allocation5 + $0x10] sm:$0xff]
    %v152 = vld [vmem:[#allocation5 + $0x18] sm:$0xff]
    %v153 = vld [vmem:[#allocation5 + $0x20] sm:$0xff]
    %v154 = vld [vmem:[#allocation5 + $0x28] sm:$0xff]
    %v155 = vld [vmem:[#allocation5 + $0x30] sm:$0xff]
    %v156 = vld [vmem:[#allocation5 + $0x38] sm:$0xff]
    %v157 = vld [vmem:[#allocation5 + $0x40] sm:$0xff]
    %v158 = vld [vmem:[#allocation5 + $0x48] sm:$0xff]
    %v159 = vld [vmem:[#allocation5 + $0x50] sm:$0xff]
    %v160 = vld [vmem:[#allocation5 + $0x58] sm:$0xff]
    %v161 = vld [vmem:[#allocation5 + $0x60] sm:$0xff]
    %v162 = vld [vmem:[#allocation5 + $0x68] sm:$0xff]
    %v163 = vld [vmem:[#allocation5 + $0x70] sm:$0xff]
    %v164 = vld [vmem:[#allocation5 + $0x78] sm:$0xff]
    %v165 = vld [vmem:[%s4] sm:$0x1]
    %v167 = vlaneseq
    %v168 = vshrl.u32 %v167, 7
    %v169 = vsub.s32 0, %v168
    %v170 = vrot.slane %v165, %v169
    %172 = vmatprep.subr.mxu0 0.0
    %173 = vmatpush1.msra.mxu0 %v149
    %174 = vmatprep.subr.mxu0 0.0
    %175 = vmatpush1.msra.mxu0 %v150
    %176 = vmatprep.subr.mxu0 0.0
    %177 = vmatpush1.msra.mxu0 %v151
    %178 = vmatprep.subr.mxu0 0.0
    %179 = vmatpush1.msra.mxu0 %v152
    %180 = vmatprep.subr.mxu0 0.0
    %181 = vmatpush1.msra.mxu0 %v153
    %182 = vmatprep.subr.mxu0 0.0
    %183 = vmatpush1.msra.mxu0 %v154
    %184 = vmatprep.subr.mxu0 0.0
    %185 = vmatpush1.msra.mxu0 %v155
    %186 = vmatprep.subr.mxu0 0.0
    %187 = vmatpush1.msra.mxu0 %v156
    %188 = vmatprep.subr.mxu0 0.0
    %189 = vmatpush1.msra.mxu0 %v157
    %190 = vmatprep.subr.mxu0 0.0
    %191 = vmatpush1.msra.mxu0 %v158
    %192 = vmatprep.subr.mxu0 0.0
    %193 = vmatpush1.msra.mxu0 %v159
    %194 = vmatprep.subr.mxu0 0.0
    %195 = vmatpush1.msra.mxu0 %v160
    %196 = vmatprep.subr.mxu0 0.0
    %197 = vmatpush1.msra.mxu0 %v161
    %198 = vmatprep.subr.mxu0 0.0
    %199 = vmatpush1.msra.mxu0 %v162
    %200 = vmatprep.subr.mxu0 0.0
    %201 = vmatpush1.msra.mxu0 %v163
    %202 = vmatprep.subr.mxu0 0.0
    %203 = vmatpush1.msra.mxu0 %v164
    %204 = vmatprep.subr.mxu0 0.0
    %205 = vmatpush1.msra.mxu0 0.0
    %206 = vmatprep.subr.mxu0 0.0
    %207 = vmatpush1.msra.mxu0 0.0
    %208 = vmatprep.subr.mxu0 0.0
    %209 = vmatpush1.msra.mxu0 0.0
    %210 = vmatprep.subr.mxu0 0.0
    %211 = vmatpush1.msra.mxu0 0.0
    %212 = vmatprep.subr.mxu0 0.0
    %213 = vmatpush1.msra.mxu0 0.0
    %214 = vmatprep.subr.mxu0 0.0
    %215 = vmatpush1.msra.mxu0 0.0
    %216 = vmatprep.subr.mxu0 0.0
    %217 = vmatpush1.msra.mxu0 0.0
    %218 = vmatprep.subr.mxu0 0.0
    %219 = vmatpush1.msra.mxu0 0.0
    %220 = vmatprep.subr.mxu0 0.0
    %221 = vmatpush1.msra.mxu0 0.0
    %222 = vmatprep.subr.mxu0 0.0
    %223 = vmatpush1.msra.mxu0 0.0
    %224 = vmatprep.subr.mxu0 0.0
    %225 = vmatpush1.msra.mxu0 0.0
    %226 = vmatprep.subr.mxu0 0.0
    %227 = vmatpush1.msra.mxu0 0.0
    %228 = vmatprep.subr.mxu0 0.0
    %229 = vmatpush1.msra.mxu0 0.0
    %230 = vmatprep.subr.mxu0 0.0
    %231 = vmatpush1.msra.mxu0 0.0
    %232 = vmatprep.subr.mxu0 0.0
    %233 = vmatpush1.msra.mxu0 0.0
    %234 = vmatprep.subr.mxu0 0.0
    %235 = vmatpush1.msra.mxu0 0.0
    %236 = vmatprep.mubr.f32.mxu0 0.0
    %237 = vmatmul.mubr.f32.gmra.mrb[0].mxu0 %v148
    %v238 = vpop.f32.mrb[0].mxu0
    %v239 = vadd.f32 %v170, %v238
    %v240 = vpop.f32.mrb[0].mxu0
    %241 = vdwg.mxu0
    %v242 = vmax.f32 %v239, 0.0
    %243 = vst [vmem:[%s5] sm:$0xff] %v242
    // Predicated region
    $region34: #{_forward_impl.1} parent=1 // pred_check
      _
    $region35: #{_forward_impl.1} parent=1 // pred_check_branch
      %245 = sbr.rel (0) target = $region37
    $region36: #{_forward_impl.1} parent=1 // pred_region
      _
    $region37: #{_forward_impl.1} parent=1 // pred_fallthru
      _
    // Predicated region
    $region38: #{_forward_impl.1} parent=1 // pred_check
      _
    $region39: #{_forward_impl.1} parent=1 // pred_check_branch
      %247 = sbr.rel (0) target = $region41
    $region40: #{_forward_impl.1} parent=1 // pred_region
      _
    $region41: #{_forward_impl.1} parent=1 // pred_fallthru
      _
    %248 = vsyncpa [#allocation4], 1
    %249 = vsyncpa [#allocation6], 1

// kernel: _forward_impl.1
$region0: #{_forward_impl.1}
  #allocation0 [shape = 'u32[]', space=smem, size = 0x4, offset = 0x4, fixed_abs, tag = 'smem constant byte address 0x4 - core index']
  #allocation1 [shape = 'u32[144,128]{1,0:T(1,128)}', space=vmem, size = 0x12000, scoped, tag = 'internal scratch']
  #allocation2 [shape = 'f32[8,128]{1,0:T(8,128)}', space=vmem, size = 0x1000, scoped, tag = 'scratch operand']
  %s0 = inlined_call_operand.vmem [shape: f32[8,128], index: 0, kind: input, shape index: {}]
  %s1 = inlined_call_operand.hbm [shape: f32[128,128], index: 1, kind: input, shape index: {}]
  %s2 = inlined_call_operand.vmem [shape: f32[1,128], index: 2, kind: input, shape index: {}]
  %s3 = inlined_call_operand.hbm [shape: f32[128,128], index: 3, kind: input, shape index: {}]
  %s4 = inlined_call_operand.vmem [shape: f32[1,128], index: 4, kind: input, shape index: {}]
  %s5 = inlined_call_operand.vmem [shape: f32[8,128], index: 5, kind: output, shape index: {}]
  %s6 = sld [smem:[#allocation0]]
  $region42: #{_forward_impl.1} parent=0
    _
  %s8 = ssub.s32 1, %s6
  %s9 = scalar_select 0, %s8, %s6
  $region1: #{_forward_impl.1} parent=0
    #allocation3 [shape = 'u8[65536]{0}', space=vmem, size = 0x10000, scoped, tag = 'input window, operand 1, single buffered']
    #allocation4 [shape = 's32[1]{0}', space=sflag, size = 0x4, scoped, tag = 'scoped memory for _forward_impl.1']
    #allocation5 [shape = 'u8[65536]{0}', space=vmem, size = 0x10000, scoped, tag = 'input window, operand 3, single buffered']
    #allocation6 [shape = 's32[1]{0}', space=sflag, size = 0x4, scoped, tag = 'scoped memory for _forward_impl.1']
    %10 = vsyncpa [#allocation4], 0
    %11 = vsyncpa [#allocation6], 0
    // Predicated region
    $region2: #{_forward_impl.1} parent=1 // pred_check
      _
    $region3: #{_forward_impl.1} parent=1 // pred_check_branch
      %13 = sbr.rel (0) target = $region5
    $region4: #{_forward_impl.1} parent=1 // pred_region
      _
    $region5: #{_forward_impl.1} parent=1 // pred_fallthru
      _
    // Predicated region
    $region6: #{_forward_impl.1} parent=1 // pred_check
      _
    $region7: #{_forward_impl.1} parent=1 // pred_check_branch
      %15 = sbr.rel (0) target = $region9
    $region8: #{_forward_impl.1} parent=1 // pred_region
      %s17 = ssub.s32 2048, 2048
      %18 = vsyncadd [#allocation4], %s17
      %s19 = sshll.u32 [#allocation3], 4
      %s20 = int_to_ptr.vmem [resolvable:$true] %s19
      %25 = dma.hbm_to_vmem [thread:$0]  %s1, 2048, %s20, [#allocation4], 128, 128, 8
    $region9: #{_forward_impl.1} parent=1 // pred_fallthru
      _
    // Predicated region
    $region10: #{_forward_impl.1} parent=1 // pred_check
      _
    $region11: #{_forward_impl.1} parent=1 // pred_check_branch
      %27 = sbr.rel (0) target = $region13
    $region12: #{_forward_impl.1} parent=1 // pred_region
      _
    $region13: #{_forward_impl.1} parent=1 // pred_fallthru
      _
    // Predicated region
    $region14: #{_forward_impl.1} parent=1 // pred_check
      _
    $region15: #{_forward_impl.1} parent=1 // pred_check_branch
      %29 = sbr.rel (0) target = $region17
    $region16: #{_forward_impl.1} parent=1 // pred_region
      %s31 = ssub.s32 2048, 2048
      %32 = vsyncadd [#allocation6], %s31
      %s33 = sshll.u32 [#allocation5], 4
      %s34 = int_to_ptr.vmem [resolvable:$true] %s33
      %39 = dma.hbm_to_vmem [thread:$0]  %s3, 2048, %s34, [#allocation6], 128, 128, 8
    $region17: #{_forward_impl.1} parent=1 // pred_fallthru
      _
    // Predicated region
    $region18: #{_forward_impl.1} parent=1 // pred_check
      _
    $region19: #{_forward_impl.1} parent=1 // pred_check_branch
      %41 = sbr.rel (0) target = $region21
    $region20: #{_forward_impl.1} parent=1 // pred_region
      _
    $region21: #{_forward_impl.1} parent=1 // pred_fallthru
      _
    // Predicated region
    $region22: #{_forward_impl.1} parent=1 // pred_check
      _
    $region23: #{_forward_impl.1} parent=1 // pred_check_branch
      %43 = sbr.rel (0) target = $region25
    $region24: #{_forward_impl.1} parent=1 // pred_region
      %44 = dma.done [#allocation4], 2048
    $region25: #{_forward_impl.1} parent=1 // pred_fallthru
      _
    // Predicated region
    $region26: #{_forward_impl.1} parent=1 // pred_check
      _
    $region27: #{_forward_impl.1} parent=1 // pred_check_branch
      %46 = sbr.rel (0) target = $region29
    $region28: #{_forward_impl.1} parent=1 // pred_region
      %47 = dma.done [#allocation6], 2048
    $region29: #{_forward_impl.1} parent=1 // pred_fallthru
      _
    %p48 = scmp.eq.s32.totalorder 0, 0
    // Predicated region
    $region30: #{_forward_impl.1} parent=1 // pred_check
      %p49 = pneg %p48
    $region31: #{_forward_impl.1} parent=1 // pred_check_branch
      %51 = sbr.rel (%p49) target = $region33
    $region32: #{_forward_impl.1} parent=1 // pred_region
      %v52 = vld [vmem:[%s0] sm:$0xff]
      %v53 = vld [vmem:[#allocation3] sm:$0xff]
      %v54 = vld [vmem:[#allocation3 + $0x8] sm:$0xff]
      %v55 = vld [vmem:[#allocation3 + $0x10] sm:$0xff]
      %v56 = vld [vmem:[#allocation3 + $0x18] sm:$0xff]
      %v57 = vld [vmem:[#allocation3 + $0x20] sm:$0xff]
      %v58 = vld [vmem:[#allocation3 + $0x28] sm:$0xff]
      %v59 = vld [vmem:[#allocation3 + $0x30] sm:$0xff]
      %v60 = vld [vmem:[#allocation3 + $0x38] sm:$0xff]
      %v61 = vld [vmem:[#allocation3 + $0x40] sm:$0xff]
      %v62 = vld [vmem:[#allocation3 + $0x48] sm:$0xff]
      %v63 = vld [vmem:[#allocation3 + $0x50] sm:$0xff]
      %v64 = vld [vmem:[#allocation3 + $0x58] sm:$0xff]
      %v65 = vld [vmem:[#allocation3 + $0x60] sm:$0xff]
      %v66 = vld [vmem:[#allocation3 + $0x68] sm:$0xff]
      %v67 = vld [vmem:[#allocation3 + $0x70] sm:$0xff]
      %v68 = vld [vmem:[#allocation3 + $0x78] sm:$0xff]
      %v69 = vld [vmem:[%s2] sm:$0x1]
      %v71 = vlaneseq
      %v72 = vshrl.u32 %v71, 7
      %v73 = vsub.s32 0, %v72
      %v74 = vrot.slane %v69, %v73
      %76 = vmatprep.subr.mxu0 0.0
      %77 = vmatpush1.msra.mxu0 %v53
      %78 = vmatprep.subr.mxu0 0.0
      %79 = vmatpush1.msra.mxu0 %v54
      %80 = vmatprep.subr.mxu0 0.0
      %81 = vmatpush1.msra.mxu0 %v55
      %82 = vmatprep.subr.mxu0 0.0
      %83 = vmatpush1.msra.mxu0 %v56
      %84 = vmatprep.subr.mxu0 0.0
      %85 = vmatpush1.msra.mxu0 %v57
      %86 = vmatprep.subr.mxu0 0.0
      %87 = vmatpush1.msra.mxu0 %v58
      %88 = vmatprep.subr.mxu0 0.0
      %89 = vmatpush1.msra.mxu0 %v59
      %90 = vmatprep.subr.mxu0 0.0
      %91 = vmatpush1.msra.mxu0 %v60
      %92 = vmatprep.subr.mxu0 0.0
      %93 = vmatpush1.msra.mxu0 %v61
      %94 = vmatprep.subr.mxu0 0.0
      %95 = vmatpush1.msra.mxu0 %v62
      %96 = vmatprep.subr.mxu0 0.0
      %97 = vmatpush1.msra.mxu0 %v63
      %98 = vmatprep.subr.mxu0 0.0
      %99 = vmatpush1.msra.mxu0 %v64
      %100 = vmatprep.subr.mxu0 0.0
      %101 = vmatpush1.msra.mxu0 %v65
      %102 = vmatprep.subr.mxu0 0.0
      %103 = vmatpush1.msra.mxu0 %v66
      %104 = vmatprep.subr.mxu0 0.0
      %105 = vmatpush1.msra.mxu0 %v67
      %106 = vmatprep.subr.mxu0 0.0
      %107 = vmatpush1.msra.mxu0 %v68
      %108 = vmatprep.subr.mxu0 0.0
      %109 = vmatpush1.msra.mxu0 0.0
      %110 = vmatprep.subr.mxu0 0.0
      %111 = vmatpush1.msra.mxu0 0.0
      %112 = vmatprep.subr.mxu0 0.0
      %113 = vmatpush1.msra.mxu0 0.0
      %114 = vmatprep.subr.mxu0 0.0
      %115 = vmatpush1.msra.mxu0 0.0
      %116 = vmatprep.subr.mxu0 0.0
      %117 = vmatpush1.msra.mxu0 0.0
      %118 = vmatprep.subr.mxu0 0.0
      %119 = vmatpush1.msra.mxu0 0.0
      %120 = vmatprep.subr.mxu0 0.0
      %121 = vmatpush1.msra.mxu0 0.0
      %122 = vmatprep.subr.mxu0 0.0
      %123 = vmatpush1.msra.mxu0 0.0
      %124 = vmatprep.subr.mxu0 0.0
      %125 = vmatpush1.msra.mxu0 0.0
      %126 = vmatprep.subr.mxu0 0.0
      %127 = vmatpush1.msra.mxu0 0.0
      %128 = vmatprep.subr.mxu0 0.0
      %129 = vmatpush1.msra.mxu0 0.0
      %130 = vmatprep.subr.mxu0 0.0
      %131 = vmatpush1.msra.mxu0 0.0
      %132 = vmatprep.subr.mxu0 0.0
      %133 = vmatpush1.msra.mxu0 0.0
      %134 = vmatprep.subr.mxu0 0.0
      %135 = vmatpush1.msra.mxu0 0.0
      %136 = vmatprep.subr.mxu0 0.0
      %137 = vmatpush1.msra.mxu0 0.0
      %138 = vmatprep.subr.mxu0 0.0
      %139 = vmatpush1.msra.mxu0 0.0
      %140 = vmatprep.mubr.f32.mxu0 0.0
      %141 = vmatmul.mubr.f32.gmra.mrb[0].mxu0 %v52
      %v142 = vpop.f32.mrb[0].mxu0
      %v143 = vadd.f32 %v74, %v142
      %v144 = vpop.f32.mrb[0].mxu0
      %145 = vdwg.mxu0
      %v146 = vmax.f32 %v143, 0.0
      %147 = vst [vmem:[#allocation2] sm:$0xff] %v146
    $region33: #{_forward_impl.1} parent=1 // pred_fallthru
      _
    %v148 = vld [vmem:[#allocation2] sm:$0xff]
    %v149 = vld [vmem:[#allocation5] sm:$0xff]
    %v150 = vld [vmem:[#allocation5 + $0x8] sm:$0xff]
    %v151 = vld [vmem:[#allocation5 + $0x10] sm:$0xff]
    %v152 = vld [vmem:[#allocation5 + $0x18] sm:$0xff]
    %v153 = vld [vmem:[#allocation5 + $0x20] sm:$0xff]
    %v154 = vld [vmem:[#allocation5 + $0x28] sm:$0xff]
    %v155 = vld [vmem:[#allocation5 + $0x30] sm:$0xff]
    %v156 = vld [vmem:[#allocation5 + $0x38] sm:$0xff]
    %v157 = vld [vmem:[#allocation5 + $0x40] sm:$0xff]
    %v158 = vld [vmem:[#allocation5 + $0x48] sm:$0xff]
    %v159 = vld [vmem:[#allocation5 + $0x50] sm:$0xff]
    %v160 = vld [vmem:[#allocation5 + $0x58] sm:$0xff]
    %v161 = vld [vmem:[#allocation5 + $0x60] sm:$0xff]
    %v162 = vld [vmem:[#allocation5 + $0x68] sm:$0xff]
    %v163 = vld [vmem:[#allocation5 + $0x70] sm:$0xff]
    %v164 = vld [vmem:[#allocation5 + $0x78] sm:$0xff]
    %v165 = vld [vmem:[%s4] sm:$0x1]
    %v167 = vlaneseq
    %v168 = vshrl.u32 %v167, 7
    %v169 = vsub.s32 0, %v168
    %v170 = vrot.slane %v165, %v169
    %172 = vmatprep.subr.mxu0 0.0
    %173 = vmatpush1.msra.mxu0 %v149
    %174 = vmatprep.subr.mxu0 0.0
    %175 = vmatpush1.msra.mxu0 %v150
    %176 = vmatprep.subr.mxu0 0.0
    %177 = vmatpush1.msra.mxu0 %v151
    %178 = vmatprep.subr.mxu0 0.0
    %179 = vmatpush1.msra.mxu0 %v152
    %180 = vmatprep.subr.mxu0 0.0
    %181 = vmatpush1.msra.mxu0 %v153
    %182 = vmatprep.subr.mxu0 0.0
    %183 = vmatpush1.msra.mxu0 %v154
    %184 = vmatprep.subr.mxu0 0.0
    %185 = vmatpush1.msra.mxu0 %v155
    %186 = vmatprep.subr.mxu0 0.0
    %187 = vmatpush1.msra.mxu0 %v156
    %188 = vmatprep.subr.mxu0 0.0
    %189 = vmatpush1.msra.mxu0 %v157
    %190 = vmatprep.subr.mxu0 0.0
    %191 = vmatpush1.msra.mxu0 %v158
    %192 = vmatprep.subr.mxu0 0.0
    %193 = vmatpush1.msra.mxu0 %v159
    %194 = vmatprep.subr.mxu0 0.0
    %195 = vmatpush1.msra.mxu0 %v160
    %196 = vmatprep.subr.mxu0 0.0
    %197 = vmatpush1.msra.mxu0 %v161
    %198 = vmatprep.subr.mxu0 0.0
    %199 = vmatpush1.msra.mxu0 %v162
    %200 = vmatprep.subr.mxu0 0.0
    %201 = vmatpush1.msra.mxu0 %v163
    %202 = vmatprep.subr.mxu0 0.0
    %203 = vmatpush1.msra.mxu0 %v164
    %204 = vmatprep.subr.mxu0 0.0
    %205 = vmatpush1.msra.mxu0 0.0
    %206 = vmatprep.subr.mxu0 0.0
    %207 = vmatpush1.msra.mxu0 0.0
    %208 = vmatprep.subr.mxu0 0.0
    %209 = vmatpush1.msra.mxu0 0.0
    %210 = vmatprep.subr.mxu0 0.0
    %211 = vmatpush1.msra.mxu0 0.0
    %212 = vmatprep.subr.mxu0 0.0
    %213 = vmatpush1.msra.mxu0 0.0
    %214 = vmatprep.subr.mxu0 0.0
    %215 = vmatpush1.msra.mxu0 0.0
    %216 = vmatprep.subr.mxu0 0.0
    %217 = vmatpush1.msra.mxu0 0.0
    %218 = vmatprep.subr.mxu0 0.0
    %219 = vmatpush1.msra.mxu0 0.0
    %220 = vmatprep.subr.mxu0 0.0
    %221 = vmatpush1.msra.mxu0 0.0
    %222 = vmatprep.subr.mxu0 0.0
    %223 = vmatpush1.msra.mxu0 0.0
    %224 = vmatprep.subr.mxu0 0.0
    %225 = vmatpush1.msra.mxu0 0.0
    %226 = vmatprep.subr.mxu0 0.0
    %227 = vmatpush1.msra.mxu0 0.0
    %228 = vmatprep.subr.mxu0 0.0
    %229 = vmatpush1.msra.mxu0 0.0
    %230 = vmatprep.subr.mxu0 0.0
    %231 = vmatpush1.msra.mxu0 0.0
    %232 = vmatprep.subr.mxu0 0.0
    %233 = vmatpush1.msra.mxu0 0.0
    %234 = vmatprep.subr.mxu0 0.0
    %235 = vmatpush1.msra.mxu0 0.0
    %236 = vmatprep.mubr.f32.mxu0 0.0
    %237 = vmatmul.mubr.f32.gmra.mrb[0].mxu0 %v148
    %v238 = vpop.f32.mrb[0].mxu0
    %v239 = vadd.f32 %v170, %v238
    %v240 = vpop.f32.mrb[0].mxu0
    %241 = vdwg.mxu0
    %v242 = vmax.f32 %v239, 0.0
    %243 = vst [vmem:[%s5] sm:$0xff] %v242
    // Predicated region
    $region34: #{_forward_impl.1} parent=1 // pred_check
      _
    $region35: #{_forward_impl.1} parent=1 // pred_check_branch
      %245 = sbr.rel (0) target = $region37
    $region36: #{_forward_impl.1} parent=1 // pred_region
      _
    $region37: #{_forward_impl.1} parent=1 // pred_fallthru
      _
    // Predicated region
    $region38: #{_forward_impl.1} parent=1 // pred_check
      _
    $region39: #{_forward_impl.1} parent=1 // pred_check_branch
      %247 = sbr.rel (0) target = $region41
    $region40: #{_forward_impl.1} parent=1 // pred_region
      _
    $region41: #{_forward_impl.1} parent=1 // pred_fallthru
      _
    %248 = vsyncpa [#allocation4], 1
    %249 = vsyncpa [#allocation6], 1

</llo_original>
